<compile_context>
chip_gen: v5e
topology: v5e:2x2
jax: 0.10.0
libtpu: 0.0.40
codegen_flags: <defaults>
</compile_context>

<pallas_src>
import functools

import jax
import jax.numpy as jnp
from jax.experimental import pallas as pl
from jax.experimental.pallas import tpu as pltpu


def _sigmoid(x):
    # sigmoid(x) == 0.5 * tanh(0.5 * x) + 0.5  (single EUP op + VPU fma)
    return 0.5 * jnp.tanh(0.5 * x) + 0.5


def genetic_memory_cell_seq_kernel(x_ref, h0_ref, c0_ref,
                                   w_ref, b_ref, wmg_ref, bmg_ref,
                                   out_ref,
                                   h_scr, c_scr,
                                   *, hidden, learning_efficiency):
    t = pl.program_id(0)
    H = hidden

    # Load the initial recurrent state into VMEM scratch once.
    @pl.when(t == 0)
    def _():
        h_scr[...] = h0_ref[...]
        c_scr[...] = c0_ref[...]

    # Fused gate matmul: [x_t | h] @ [W_ih^T ; W_hh^T] + (b_ih + b_hh)
    xh = jnp.concatenate([x_ref[...], h_scr[...]], axis=1)          # (B, D_in+H)
    gates = (jnp.dot(xh, w_ref[...], preferred_element_type=jnp.float32)
             + b_ref[...])                                           # (B, 4H)

    # Gate order matches nn.LSTMCell: i, f, g, o.
    # NOTE: 32-lane slices of a 128-lane vreg cost a cheap XLU rotate each; at
    # H=32 this is negligible next to the structural wins above.
    i_g = _sigmoid(gates[:, 0 * H:1 * H])
    f_g = _sigmoid(gates[:, 1 * H:2 * H])
    g_g = jnp.tanh(gates[:, 2 * H:3 * H])
    o_g = _sigmoid(gates[:, 3 * H:4 * H])

    c_new = f_g * c_scr[...] + i_g * g_g
    h_lstm = o_g * jnp.tanh(c_new)

    # memory_gate: Linear(H, H) + sigmoid, then scale by learning_efficiency.
    mi = _sigmoid(
        jnp.dot(h_lstm, wmg_ref[...], preferred_element_type=jnp.float32)
        + bmg_ref[...])
    h_new = h_lstm * mi * learning_efficiency

    # Carry state for the next timestep (the *scaled* h, matching PyTorch
    # usage where the returned h is fed back as state).
    h_scr[...] = h_new
    c_scr[...] = c_new

    # Packed lane-dense output: [h' | c'] per step.
    out_ref[...] = jnp.concatenate([h_new, c_new], axis=1)


def genetic_memory_cell_sequence(x_seq, state, params, *, learning_efficiency):
    """Run the cell over a whole sequence in one pallas_call.

    x_seq:  (T, B, D_in) f32
    state:  (h0, c0) each (B, H) f32, or None (zeros)
    params: (w_fused (D_in+H, 4H), b (1, 4H), w_mg^T (H, H), b_mg (1, H))
    returns (h_seq, c_seq), each (T, B, H).
    """
    T, B, D_in = x_seq.shape
    w_fused, b, wmg_t, bmg = params
    H = wmg_t.shape[0]

    if state is None:
        h0 = jnp.zeros((B, H), jnp.float32)
        c0 = jnp.zeros((B, H), jnp.float32)
    else:
        h0, c0 = state

    kernel = functools.partial(
        genetic_memory_cell_seq_kernel,
        hidden=H,
        learning_efficiency=learning_efficiency,
    )

    # Whole-array residents (constant block index => DMA'd into VMEM once).
    def resident(arr):
        n = arr.ndim
        return pl.BlockSpec(arr.shape, lambda t, _n=n: (0,) * _n)

    packed = pl.pallas_call(
        kernel,
        out_shape=jax.ShapeDtypeStruct((T, B, 2 * H), jnp.float32),
        grid=(T,),
        in_specs=[
            pl.BlockSpec((None, B, D_in), lambda t: (t, 0, 0)),  # x_t (pipelined)
            resident(h0),        # initial h
            resident(c0),        # initial c
            resident(w_fused),   # [W_ih^T ; W_hh^T]   (D_in+H, 4H)
            resident(b),         # b_ih + b_hh         (1, 4H)
            resident(wmg_t),     # W_mg^T              (H, H)
            resident(bmg),       # b_mg                (1, H)
        ],
        out_specs=pl.BlockSpec((None, B, 2 * H), lambda t: (t, 0, 0)),
        scratch_shapes=[
            pltpu.VMEM((B, H), jnp.float32),   # h carry
            pltpu.VMEM((B, H), jnp.float32),   # c carry
        ],
        compiler_params=pltpu.CompilerParams(
            dimension_semantics=("arbitrary",),   # time axis is a recurrence
        ),
    )(x_seq, h0, c0, w_fused, b, wmg_t, bmg)

    return packed[:, :, :H], packed[:, :, H:]


def genetic_memory_cell(x, state, params, *, learning_efficiency):
    """Single-step API matching the PyTorch module: x (B, D_in) -> (h', c')."""
    h_seq, c_seq = genetic_memory_cell_sequence(
        x[None], state, params, learning_efficiency=learning_efficiency)
    return h_seq[0], c_seq[0]


def reference_sequence(x_seq, state, raw_params, *, learning_efficiency):
    """Pure-JAX reference: step the PyTorch-equivalent cell T times."""
    wih_t, whh_t, b_ih, b_hh, wmg_t, bmg = raw_params
    H = wmg_t.shape[0]
    B = x_seq.shape[1]
    if state is None:
        h = jnp.zeros((B, H), jnp.float32)
        c = jnp.zeros((B, H), jnp.float32)
    else:
        h, c = state
    hs, cs = [], []
    for t in range(x_seq.shape[0]):
        gates = x_seq[t] @ wih_t + h @ whh_t + b_ih + b_hh
        i_g = jax.nn.sigmoid(gates[:, 0 * H:1 * H])
        f_g = jax.nn.sigmoid(gates[:, 1 * H:2 * H])
        g_g = jnp.tanh(gates[:, 2 * H:3 * H])
        o_g = jax.nn.sigmoid(gates[:, 3 * H:4 * H])
        c = f_g * c + i_g * g_g
        h_lstm = o_g * jnp.tanh(c)
        mi = jax.nn.sigmoid(h_lstm @ wmg_t + bmg)
        h = h_lstm * mi * learning_efficiency
        hs.append(h)
        cs.append(c)
    return jnp.stack(hs), jnp.stack(cs)


if __name__ == "__main__":
    # genetic_traits: memory_capacity=1.0, learning_efficiency=0.8
    INPUT_SIZE = 16
    HIDDEN_SIZE = 32
    MEMORY_CAPACITY = 1.0
    LEARNING_EFFICIENCY = 0.8
    LSTM_SIZE = int(HIDDEN_SIZE * MEMORY_CAPACITY)   # 32
    BATCH = 2
    SEQ = 8

    key = jax.random.PRNGKey(0)
    ks = jax.random.split(key, 7)

    # Deterministic parameter init (shapes match nn.LSTMCell / nn.Linear),
    # stored pre-transposed for the kernel.
    scale = 1.0 / jnp.sqrt(LSTM_SIZE)
    wih_t = jax.random.uniform(ks[0], (INPUT_SIZE, 4 * LSTM_SIZE), jnp.float32,
                               -scale, scale)
    whh_t = jax.random.uniform(ks[1], (LSTM_SIZE, 4 * LSTM_SIZE), jnp.float32,
                               -scale, scale)
    b_ih = jax.random.uniform(ks[2], (1, 4 * LSTM_SIZE), jnp.float32, -scale, scale)
    b_hh = jax.random.uniform(ks[3], (1, 4 * LSTM_SIZE), jnp.float32, -scale, scale)
    wmg_t = jax.random.uniform(ks[4], (LSTM_SIZE, LSTM_SIZE), jnp.float32,
                               -scale, scale)
    bmg = jax.random.uniform(ks[5], (1, LSTM_SIZE), jnp.float32, -scale, scale)

    # Fused parameters for the kernel: one (D_in+H, 4H) gate weight, summed bias.
    w_fused = jnp.concatenate([wih_t, whh_t], axis=0)
    b = b_ih + b_hh
    fused_params = (w_fused, b, wmg_t, bmg)
    raw_params = (wih_t, whh_t, b_ih, b_hh, wmg_t, bmg)

    x_seq = jax.random.normal(ks[6], (SEQ, BATCH, INPUT_SIZE), jnp.float32)

    # --- fused multi-step recurrence (one pallas_call for all SEQ steps) ---
    h_seq, c_seq = genetic_memory_cell_sequence(
        x_seq, None, fused_params, learning_efficiency=LEARNING_EFFICIENCY)
    jax.block_until_ready((h_seq, c_seq))

    h_seq_ref, c_seq_ref = reference_sequence(
        x_seq, None, raw_params, learning_efficiency=LEARNING_EFFICIENCY)
    assert jnp.allclose(h_seq, h_seq_ref, atol=1e-4, rtol=1e-4), "h sequence mismatch"
    assert jnp.allclose(c_seq, c_seq_ref, atol=1e-4, rtol=1e-4), "c sequence mismatch"

    # --- single-step API (state=None path, exactly like the PyTorch default) ---
    h1, c1 = genetic_memory_cell(
        x_seq[0], None, fused_params, learning_efficiency=LEARNING_EFFICIENCY)
    jax.block_until_ready((h1, c1))
    assert jnp.allclose(h1, h_seq_ref[0], atol=1e-4, rtol=1e-4), "single-step h mismatch"
    assert jnp.allclose(c1, c_seq_ref[0], atol=1e-4, rtol=1e-4), "single-step c mismatch"

    print("KERNEL_OK")
</pallas_src>

<mosaic_0001>
module attributes {stable_mosaic.version = 11 : i64} {
  func.func @genetic_memory_cell_seq_kernel(%arg0: i32, %arg1: memref<1x2x16xf32, #tpu.memory_space<vmem>>, %arg2: memref<2x32xf32, #tpu.memory_space<vmem>>, %arg3: memref<2x32xf32, #tpu.memory_space<vmem>>, %arg4: memref<48x128xf32, #tpu.memory_space<vmem>>, %arg5: memref<1x128xf32, #tpu.memory_space<vmem>>, %arg6: memref<32x32xf32, #tpu.memory_space<vmem>>, %arg7: memref<1x32xf32, #tpu.memory_space<vmem>>, %arg8: memref<1x2x64xf32, #tpu.memory_space<vmem>>, %arg9: memref<2x32xf32, #tpu.memory_space<vmem>>, %arg10: memref<2x32xf32, #tpu.memory_space<vmem>>) attributes {dimension_semantics = [#tpu.dimension_semantics<arbitrary>], iteration_bounds = array<i64: 8>, scalar_prefetch = 0 : i64, scratch_operands = 2 : i64, tpu.core_type = #tpu.core_type<tc>, window_params = [{transform_indices = @transform_0, window_bounds = array<i64: 1, 2, 16>}, {pipeline_mode = #tpu.pipeline_mode<synchronous>, transform_indices = @transform_1, window_bounds = array<i64: 2, 32>}, {pipeline_mode = #tpu.pipeline_mode<synchronous>, transform_indices = @transform_2, window_bounds = array<i64: 2, 32>}, {pipeline_mode = #tpu.pipeline_mode<synchronous>, transform_indices = @transform_3, window_bounds = array<i64: 48, 128>}, {pipeline_mode = #tpu.pipeline_mode<synchronous>, transform_indices = @transform_4, window_bounds = array<i64: 1, 128>}, {pipeline_mode = #tpu.pipeline_mode<synchronous>, transform_indices = @transform_5, window_bounds = array<i64: 32, 32>}, {pipeline_mode = #tpu.pipeline_mode<synchronous>, transform_indices = @transform_6, window_bounds = array<i64: 1, 32>}, {transform_indices = @transform_7, window_bounds = array<i64: 1, 2, 64>}]} {
    %c0_i32 = arith.constant 0 : i32
    %0 = arith.cmpi eq, %arg0, %c0_i32 : i32
    %1 = arith.extui %0 : i1 to i32
    %c0_i32_0 = arith.constant 0 : i32
    %2 = arith.cmpi ne, %1, %c0_i32_0 : i32
    scf.if %2 {
      %c0_36 = arith.constant 0 : index
      %c0_37 = arith.constant 0 : index
      %65 = vector.load %arg2[%c0_36, %c0_37] : memref<2x32xf32, #tpu.memory_space<vmem>>, vector<2x32xf32>
      %c0_38 = arith.constant 0 : index
      %c0_39 = arith.constant 0 : index
      %66 = vector.load %arg9[%c0_38, %c0_39] : memref<2x32xf32, #tpu.memory_space<vmem>>, vector<2x32xf32>
      tpu.vector_store %arg9[%c0_38, %c0_39], %65 {strides = array<i32>} : memref<2x32xf32, #tpu.memory_space<vmem>>, vector<2x32xf32>,
      %c0_40 = arith.constant 0 : index
      %c0_41 = arith.constant 0 : index
      %67 = vector.load %arg3[%c0_40, %c0_41] : memref<2x32xf32, #tpu.memory_space<vmem>>, vector<2x32xf32>
      %c0_42 = arith.constant 0 : index
      %c0_43 = arith.constant 0 : index
      %68 = vector.load %arg10[%c0_42, %c0_43] : memref<2x32xf32, #tpu.memory_space<vmem>>, vector<2x32xf32>
      tpu.vector_store %arg10[%c0_42, %c0_43], %67 {strides = array<i32>} : memref<2x32xf32, #tpu.memory_space<vmem>>, vector<2x32xf32>,
    } else {
    }
    %c0 = arith.constant 0 : index
    %c0_1 = arith.constant 0 : index
    %c0_2 = arith.constant 0 : index
    %3 = vector.load %arg1[%c0, %c0_1, %c0_2] : memref<1x2x16xf32, #tpu.memory_space<vmem>>, vector<1x2x16xf32>
    %4 = vector.shape_cast %3 : vector<1x2x16xf32> to vector<2x16xf32>
    %c0_3 = arith.constant 0 : index
    %c0_4 = arith.constant 0 : index
    %5 = vector.load %arg9[%c0_3, %c0_4] : memref<2x32xf32, #tpu.memory_space<vmem>>, vector<2x32xf32>
    %6 = tpu.concatenate %4, %5 in 1 : vector<2x16xf32>, vector<2x32xf32> -> vector<2x48xf32>
    %c0_5 = arith.constant 0 : index
    %c0_6 = arith.constant 0 : index
    %7 = vector.load %arg4[%c0_5, %c0_6] : memref<48x128xf32, #tpu.memory_space<vmem>>, vector<48x128xf32>
    %cst = arith.constant dense<0.000000e+00> : vector<2x128xf32>
    %8 = tpu.matmul %6, %7, %cst {dimension_numbers = #tpu.dot_dimension_numbers<[1], [0], [0], [1], [0, 0, 1, 1], [], []>} : vector<2x48xf32>, vector<48x128xf32>, vector<2x128xf32> -> vector<2x128xf32>
    %c0_7 = arith.constant 0 : index
    %c0_8 = arith.constant 0 : index
    %9 = vector.load %arg5[%c0_7, %c0_8] : memref<1x128xf32, #tpu.memory_space<vmem>>, vector<1x128xf32>
    %10 = vector.broadcast %9 : vector<1x128xf32> to vector<2x128xf32>
    %11 = arith.addf %8, %10 : vector<2x128xf32>
    %12 = vector.extract_strided_slice %11 {offsets = [0, 0], sizes = [2, 32], strides = [1, 1]} : vector<2x128xf32> to vector<2x32xf32>
    %cst_9 = arith.constant 5.000000e-01 : f32
    %13 = vector.broadcast %cst_9 : f32 to vector<2x32xf32>
    %14 = arith.mulf %13, %12 : vector<2x32xf32>
    %15 = math.tanh %14 : vector<2x32xf32>
    %cst_10 = arith.constant 5.000000e-01 : f32
    %16 = vector.broadcast %cst_10 : f32 to vector<2x32xf32>
    %17 = arith.mulf %16, %15 : vector<2x32xf32>
    %cst_11 = arith.constant 5.000000e-01 : f32
    %18 = vector.broadcast %cst_11 : f32 to vector<2x32xf32>
    %19 = arith.addf %17, %18 : vector<2x32xf32>
    %20 = vector.extract_strided_slice %11 {offsets = [0, 32], sizes = [2, 32], strides = [1, 1]} : vector<2x128xf32> to vector<2x32xf32>
    %cst_12 = arith.constant 5.000000e-01 : f32
    %21 = vector.broadcast %cst_12 : f32 to vector<2x32xf32>
    %22 = arith.mulf %21, %20 : vector<2x32xf32>
    %23 = math.tanh %22 : vector<2x32xf32>
    %cst_13 = arith.constant 5.000000e-01 : f32
    %24 = vector.broadcast %cst_13 : f32 to vector<2x32xf32>
    %25 = arith.mulf %24, %23 : vector<2x32xf32>
    %cst_14 = arith.constant 5.000000e-01 : f32
    %26 = vector.broadcast %cst_14 : f32 to vector<2x32xf32>
    %27 = arith.addf %25, %26 : vector<2x32xf32>
    %28 = vector.extract_strided_slice %11 {offsets = [0, 64], sizes = [2, 32], strides = [1, 1]} : vector<2x128xf32> to vector<2x32xf32>
    %29 = math.tanh %28 : vector<2x32xf32>
    %30 = vector.extract_strided_slice %11 {offsets = [0, 96], sizes = [2, 32], strides = [1, 1]} : vector<2x128xf32> to vector<2x32xf32>
    %cst_15 = arith.constant 5.000000e-01 : f32
    %31 = vector.broadcast %cst_15 : f32 to vector<2x32xf32>
    %32 = arith.mulf %31, %30 : vector<2x32xf32>
    %33 = math.tanh %32 : vector<2x32xf32>
    %cst_16 = arith.constant 5.000000e-01 : f32
    %34 = vector.broadcast %cst_16 : f32 to vector<2x32xf32>
    %35 = arith.mulf %34, %33 : vector<2x32xf32>
    %cst_17 = arith.constant 5.000000e-01 : f32
    %36 = vector.broadcast %cst_17 : f32 to vector<2x32xf32>
    %37 = arith.addf %35, %36 : vector<2x32xf32>
    %c0_18 = arith.constant 0 : index
    %c0_19 = arith.constant 0 : index
    %38 = vector.load %arg10[%c0_18, %c0_19] : memref<2x32xf32, #tpu.memory_space<vmem>>, vector<2x32xf32>
    %39 = arith.mulf %27, %38 : vector<2x32xf32>
    %40 = arith.mulf %19, %29 : vector<2x32xf32>
    %41 = arith.addf %39, %40 : vector<2x32xf32>
    %42 = math.tanh %41 : vector<2x32xf32>
    %43 = arith.mulf %37, %42 : vector<2x32xf32>
    %c0_20 = arith.constant 0 : index
    %c0_21 = arith.constant 0 : index
    %44 = vector.load %arg6[%c0_20, %c0_21] : memref<32x32xf32, #tpu.memory_space<vmem>>, vector<32x32xf32>
    %cst_22 = arith.constant dense<0.000000e+00> : vector<2x32xf32>
    %45 = tpu.matmul %43, %44, %cst_22 {dimension_numbers = #tpu.dot_dimension_numbers<[1], [0], [0], [1], [0, 0, 1, 1], [], []>} : vector<2x32xf32>, vector<32x32xf32>, vector<2x32xf32> -> vector<2x32xf32>
    %c0_23 = arith.constant 0 : index
    %c0_24 = arith.constant 0 : index
    %46 = vector.load %arg7[%c0_23, %c0_24] : memref<1x32xf32, #tpu.memory_space<vmem>>, vector<1x32xf32>
    %47 = vector.broadcast %46 : vector<1x32xf32> to vector<2x32xf32>
    %48 = arith.addf %45, %47 : vector<2x32xf32>
    %cst_25 = arith.constant 5.000000e-01 : f32
    %49 = vector.broadcast %cst_25 : f32 to vector<2x32xf32>
    %50 = arith.mulf %49, %48 : vector<2x32xf32>
    %51 = math.tanh %50 : vector<2x32xf32>
    %cst_26 = arith.constant 5.000000e-01 : f32
    %52 = vector.broadcast %cst_26 : f32 to vector<2x32xf32>
    %53 = arith.mulf %52, %51 : vector<2x32xf32>
    %cst_27 = arith.constant 5.000000e-01 : f32
    %54 = vector.broadcast %cst_27 : f32 to vector<2x32xf32>
    %55 = arith.addf %53, %54 : vector<2x32xf32>
    %56 = arith.mulf %43, %55 : vector<2x32xf32>
    %cst_28 = arith.constant 8.000000e-01 : f32
    %57 = vector.broadcast %cst_28 : f32 to vector<2x32xf32>
    %58 = arith.mulf %56, %57 : vector<2x32xf32>
    %c0_29 = arith.constant 0 : index
    %c0_30 = arith.constant 0 : index
    %59 = vector.load %arg9[%c0_29, %c0_30] : memref<2x32xf32, #tpu.memory_space<vmem>>, vector<2x32xf32>
    tpu.vector_store %arg9[%c0_29, %c0_30], %58 {strides = array<i32>} : memref<2x32xf32, #tpu.memory_space<vmem>>, vector<2x32xf32>,
    %c0_31 = arith.constant 0 : index
    %c0_32 = arith.constant 0 : index
    %60 = vector.load %arg10[%c0_31, %c0_32] : memref<2x32xf32, #tpu.memory_space<vmem>>, vector<2x32xf32>
    tpu.vector_store %arg10[%c0_31, %c0_32], %41 {strides = array<i32>} : memref<2x32xf32, #tpu.memory_space<vmem>>, vector<2x32xf32>,
    %61 = tpu.concatenate %58, %41 in 1 : vector<2x32xf32>, vector<2x32xf32> -> vector<2x64xf32>
    %c0_33 = arith.constant 0 : index
    %c0_34 = arith.constant 0 : index
    %c0_35 = arith.constant 0 : index
    %62 = vector.load %arg8[%c0_33, %c0_34, %c0_35] : memref<1x2x64xf32, #tpu.memory_space<vmem>>, vector<1x2x64xf32>
    %63 = vector.shape_cast %62 : vector<1x2x64xf32> to vector<2x64xf32>
    %64 = vector.shape_cast %61 : vector<2x64xf32> to vector<1x2x64xf32>
    tpu.vector_store %arg8[%c0_33, %c0_34, %c0_35], %64 {strides = array<i32>} : memref<1x2x64xf32, #tpu.memory_space<vmem>>, vector<1x2x64xf32>,
    return
  }
  func.func @transform_0(%arg0: i32) -> (i32, i32, i32) {
    %c0_i32 = arith.constant 0 : i32
    %c0_i32_0 = arith.constant 0 : i32
    %c0_i32_1 = arith.constant 0 : i32
    return %arg0, %c0_i32, %c0_i32_0 : i32, i32, i32
  }
  func.func @transform_1(%arg0: i32) -> (i32, i32) {
    %c0_i32 = arith.constant 0 : i32
    %c0_i32_0 = arith.constant 0 : i32
    %c0_i32_1 = arith.constant 0 : i32
    return %c0_i32, %c0_i32_0 : i32, i32
  }
  func.func @transform_2(%arg0: i32) -> (i32, i32) {
    %c0_i32 = arith.constant 0 : i32
    %c0_i32_0 = arith.constant 0 : i32
    %c0_i32_1 = arith.constant 0 : i32
    return %c0_i32, %c0_i32_0 : i32, i32
  }
  func.func @transform_3(%arg0: i32) -> (i32, i32) {
    %c0_i32 = arith.constant 0 : i32
    %c0_i32_0 = arith.constant 0 : i32
    %c0_i32_1 = arith.constant 0 : i32
    return %c0_i32, %c0_i32_0 : i32, i32
  }
  func.func @transform_4(%arg0: i32) -> (i32, i32) {
    %c0_i32 = arith.constant 0 : i32
    %c0_i32_0 = arith.constant 0 : i32
    %c0_i32_1 = arith.constant 0 : i32
    return %c0_i32, %c0_i32_0 : i32, i32
  }
  func.func @transform_5(%arg0: i32) -> (i32, i32) {
    %c0_i32 = arith.constant 0 : i32
    %c0_i32_0 = arith.constant 0 : i32
    %c0_i32_1 = arith.constant 0 : i32
    return %c0_i32, %c0_i32_0 : i32, i32
  }
  func.func @transform_6(%arg0: i32) -> (i32, i32) {
    %c0_i32 = arith.constant 0 : i32
    %c0_i32_0 = arith.constant 0 : i32
    %c0_i32_1 = arith.constant 0 : i32
    return %c0_i32, %c0_i32_0 : i32, i32
  }
  func.func @transform_7(%arg0: i32) -> (i32, i32, i32) {
    %c0_i32 = arith.constant 0 : i32
    %c0_i32_0 = arith.constant 0 : i32
    %c0_i32_1 = arith.constant 0 : i32
    return %arg0, %c0_i32, %c0_i32_0 : i32, i32, i32
  }
}

</mosaic_0001>

<llo_original>
// kernel: tpu_custom_call.1
$region0: #{tpu_custom_call.1}
  #allocation0 [shape = 'u32[]', space=smem, size = 0x4, offset = 0x4, fixed_abs, tag = 'smem constant byte address 0x4 - core index']
  #allocation1 [shape = 'u32[72,128]{1,0:T(1,128)}', space=vmem, size = 0x9000, scoped, tag = 'internal scratch']
  #allocation2 [shape = 'f32[2,32]{1,0:T(2,128)}', space=vmem, size = 0x400, scoped, tag = 'scratch operand']
  #allocation3 [shape = 'f32[2,32]{1,0:T(2,128)}', space=vmem, size = 0x400, scoped, tag = 'scratch operand']
  %s0 = inlined_call_operand.hbm [shape: f32[8,2,16], index: 0, kind: input, shape index: {}]
  %s1 = inlined_call_operand.hbm [shape: f32[2,32], index: 1, kind: input, shape index: {}]
  %s2 = inlined_call_operand.hbm [shape: f32[2,32], index: 2, kind: input, shape index: {}]
  %s3 = inlined_call_operand.hbm [shape: f32[48,128], index: 3, kind: input, shape index: {}]
  %s4 = inlined_call_operand.vmem [shape: f32[1,128], index: 4, kind: input, shape index: {}]
  %s5 = inlined_call_operand.hbm [shape: f32[32,32], index: 5, kind: input, shape index: {}]
  %s6 = inlined_call_operand.vmem [shape: f32[1,32], index: 6, kind: input, shape index: {}]
  %s7 = inlined_call_operand.hbm [shape: f32[8,2,64], index: 7, kind: output, shape index: {}]
  %s8 = sld [smem:[#allocation0]]
  $region85: #{tpu_custom_call.1} parent=0
    _
  %s10 = ssub.s32 1, %s8
  %s11 = scalar_select 0, %s10, %s8
  $region1: #{tpu_custom_call.1} parent=0
    #allocation4 [shape = 'u8[2048]{0}', space=vmem, size = 0x800, scoped, tag = 'input window, operand 0']
    #allocation5 [shape = 's32[2]{0}', space=sflag, size = 0x8, scoped, tag = 'scoped memory for tpu_custom_call.1']
    #allocation6 [shape = 's32[2]{0}', space=sflag, size = 0x8, scoped, tag = 'scoped memory for tpu_custom_call.1']
    #allocation7 [shape = 'u8[1024]{0}', space=vmem, size = 0x400, scoped, tag = 'input window, operand 1, single buffered']
    #allocation8 [shape = 's32[1]{0}', space=sflag, size = 0x4, scoped, tag = 'scoped memory for tpu_custom_call.1']
    #allocation9 [shape = 'u8[1024]{0}', space=vmem, size = 0x400, scoped, tag = 'input window, operand 2, single buffered']
    #allocation10 [shape = 'u8[24576]{0}', space=vmem, size = 0x6000, scoped, tag = 'input window, operand 3, single buffered']
    #allocation11 [shape = 's32[1]{0}', space=sflag, size = 0x4, scoped, tag = 'scoped memory for tpu_custom_call.1']
    #allocation12 [shape = 'u8[16384]{0}', space=vmem, size = 0x4000, scoped, tag = 'input window, operand 5, single buffered']
    #allocation13 [shape = 'u8[2048]{0}', space=vmem, size = 0x800, scoped, tag = 'output window, operand 0']
    %12 = vsyncpa [#allocation5], 0
    %s13 = scalar_lea.sflag [#allocation5], 1
    %14 = vsyncpa %s13, 0
    %15 = vsyncpa [#allocation8], 0
    %16 = vsyncpa [#allocation11], 0
    %17 = vsyncpa [#allocation6], 0
    %s18 = scalar_lea.sflag [#allocation6], 1
    %19 = vsyncpa %s18, 0
    loop: start=0, step=1, limit=10
    $region2: #{tpu_custom_call.1} parent=1 // loop_pre_header
      _
    $region3: #{tpu_custom_call.1} parent=1 // loop_header
      %s21 = sphi 0, %s25
      %p22 = scmp.ge.s32.totalorder %s21, 10
      %s31 = sphi 0, %s33
      %s34 = sphi 0, %s31
      %s35 = sphi 0, %s34
      %s51 = sphi 0, %s35
      %s55 = sphi 0, %s55
      %s57 = sphi 0, %s55
      %s58 = sphi 0, %s57
      %s72 = sphi 0, %s58
      %s76 = sphi 0, %s76
      %s78 = sphi 0, %s76
      %s79 = sphi 0, %s78
      %s93 = sphi 0, %s79
      %s97 = sphi 0, %s97
      %s99 = sphi 0, %s97
      %s100 = sphi 0, %s99
      %s114 = sphi 0, %s100
      %s118 = sphi 0, %s118
      %s120 = sphi 0, %s118
      %s121 = sphi 0, %s120
      %s135 = sphi 0, %s121
      %s139 = sphi 0, %s139
      %s141 = sphi 0, %s139
      %s142 = sphi 0, %s141
      %s156 = sphi 0, %s142
      %s160 = sphi 0, %s160
      %s162 = sphi 0, %s160
      %s163 = sphi 0, %s162
      %s177 = sphi 0, %s163
      %s183 = sphi 0, %s185
      %s186 = sphi 0, %s183
      %s187 = sphi 0, %s186
      %s203 = sphi 0, %s187
    $region4: #{tpu_custom_call.1} parent=1 // loop_header_branch
      %24 = sbr.rel (%p22) target = $region8
    $region5: #{tpu_custom_call.1} parent=1 // loop_body
      %s26 = ssub.s32 %s21, 1
      %s27 = ssub.s32 %s21, 2
      %s28 = sadd.s32 %s21, 1
      %s29 = ssub.s32 %s21, %s28
      %p30 = scmp.eq.s32.totalorder %s29, 0
      %s32 = sadd.s32 %s31, 1
      %s33 = scalar_select %p30, %s31, %s32
      %p36 = pneg %p30
      %p37 = scmp.eq.s32.totalorder %s21, 7
      %p38 = por %p36, %p37
      %p39 = scmp.ne.s32.totalorder %s31, %s34
      %p40 = scmp.eq.s32.totalorder %s21, 0
      %p41 = por %p39, %p40
      %p42 = scmp.ne.s32.totalorder %s31, %s34
      %p43 = scmp.eq.s32.totalorder %s26, 7
      %p44 = por %p42, %p43
      %p45 = scmp.ne.s32.totalorder %s34, %s35
      %p46 = scmp.eq.s32.totalorder %s26, 0
      %p47 = por %p45, %p46
      %p48 = scmp.ne.s32.totalorder %s34, %s35
      %p49 = scmp.eq.s32.totalorder %s27, 7
      %p50 = por %p48, %p49
      %p52 = scmp.ne.s32.totalorder %s35, %s51
      %p53 = scmp.eq.s32.totalorder %s27, 0
      %p54 = por %p52, %p53
      %s56 = sadd.s32 %s55, 1
      %p59 = scmp.eq.s32.totalorder %s21, 7
      %p60 = scmp.ne.s32.totalorder %s55, %s57
      %p61 = scmp.eq.s32.totalorder %s21, 0
      %p62 = por %p60, %p61
      %p63 = scmp.ne.s32.totalorder %s55, %s57
      %p64 = scmp.eq.s32.totalorder %s26, 7
      %p65 = por %p63, %p64
      %p66 = scmp.ne.s32.totalorder %s57, %s58
      %p67 = scmp.eq.s32.totalorder %s26, 0
      %p68 = por %p66, %p67
      %p69 = scmp.ne.s32.totalorder %s57, %s58
      %p70 = scmp.eq.s32.totalorder %s27, 7
      %p71 = por %p69, %p70
      %p73 = scmp.ne.s32.totalorder %s58, %s72
      %p74 = scmp.eq.s32.totalorder %s27, 0
      %p75 = por %p73, %p74
      %s77 = sadd.s32 %s76, 1
      %p80 = scmp.eq.s32.totalorder %s21, 7
      %p81 = scmp.ne.s32.totalorder %s76, %s78
      %p82 = scmp.eq.s32.totalorder %s21, 0
      %p83 = por %p81, %p82
      %p84 = scmp.ne.s32.totalorder %s76, %s78
      %p85 = scmp.eq.s32.totalorder %s26, 7
      %p86 = por %p84, %p85
      %p87 = scmp.ne.s32.totalorder %s78, %s79
      %p88 = scmp.eq.s32.totalorder %s26, 0
      %p89 = por %p87, %p88
      %p90 = scmp.ne.s32.totalorder %s78, %s79
      %p91 = scmp.eq.s32.totalorder %s27, 7
      %p92 = por %p90, %p91
      %p94 = scmp.ne.s32.totalorder %s79, %s93
      %p95 = scmp.eq.s32.totalorder %s27, 0
      %p96 = por %p94, %p95
      %s98 = sadd.s32 %s97, 1
      %p101 = scmp.eq.s32.totalorder %s21, 7
      %p102 = scmp.ne.s32.totalorder %s97, %s99
      %p103 = scmp.eq.s32.totalorder %s21, 0
      %p104 = por %p102, %p103
      %p105 = scmp.ne.s32.totalorder %s97, %s99
      %p106 = scmp.eq.s32.totalorder %s26, 7
      %p107 = por %p105, %p106
      %p108 = scmp.ne.s32.totalorder %s99, %s100
      %p109 = scmp.eq.s32.totalorder %s26, 0
      %p110 = por %p108, %p109
      %p111 = scmp.ne.s32.totalorder %s99, %s100
      %p112 = scmp.eq.s32.totalorder %s27, 7
      %p113 = por %p111, %p112
      %p115 = scmp.ne.s32.totalorder %s100, %s114
      %p116 = scmp.eq.s32.totalorder %s27, 0
      %p117 = por %p115, %p116
      %s119 = sadd.s32 %s118, 1
      %p122 = scmp.eq.s32.totalorder %s21, 7
      %p123 = scmp.ne.s32.totalorder %s118, %s120
      %p124 = scmp.eq.s32.totalorder %s21, 0
      %p125 = por %p123, %p124
      %p126 = scmp.ne.s32.totalorder %s118, %s120
      %p127 = scmp.eq.s32.totalorder %s26, 7
      %p128 = por %p126, %p127
      %p129 = scmp.ne.s32.totalorder %s120, %s121
      %p130 = scmp.eq.s32.totalorder %s26, 0
      %p131 = por %p129, %p130
      %p132 = scmp.ne.s32.totalorder %s120, %s121
      %p133 = scmp.eq.s32.totalorder %s27, 7
      %p134 = por %p132, %p133
      %p136 = scmp.ne.s32.totalorder %s121, %s135
      %p137 = scmp.eq.s32.totalorder %s27, 0
      %p138 = por %p136, %p137
      %s140 = sadd.s32 %s139, 1
      %p143 = scmp.eq.s32.totalorder %s21, 7
      %p144 = scmp.ne.s32.totalorder %s139, %s141
      %p145 = scmp.eq.s32.totalorder %s21, 0
      %p146 = por %p144, %p145
      %p147 = scmp.ne.s32.totalorder %s139, %s141
      %p148 = scmp.eq.s32.totalorder %s26, 7
      %p149 = por %p147, %p148
      %p150 = scmp.ne.s32.totalorder %s141, %s142
      %p151 = scmp.eq.s32.totalorder %s26, 0
      %p152 = por %p150, %p151
      %p153 = scmp.ne.s32.totalorder %s141, %s142
      %p154 = scmp.eq.s32.totalorder %s27, 7
      %p155 = por %p153, %p154
      %p157 = scmp.ne.s32.totalorder %s142, %s156
      %p158 = scmp.eq.s32.totalorder %s27, 0
      %p159 = por %p157, %p158
      %s161 = sadd.s32 %s160, 1
      %p164 = scmp.eq.s32.totalorder %s21, 7
      %p165 = scmp.ne.s32.totalorder %s160, %s162
      %p166 = scmp.eq.s32.totalorder %s21, 0
      %p167 = por %p165, %p166
      %p168 = scmp.ne.s32.totalorder %s160, %s162
      %p169 = scmp.eq.s32.totalorder %s26, 7
      %p170 = por %p168, %p169
      %p171 = scmp.ne.s32.totalorder %s162, %s163
      %p172 = scmp.eq.s32.totalorder %s26, 0
      %p173 = por %p171, %p172
      %p174 = scmp.ne.s32.totalorder %s162, %s163
      %p175 = scmp.eq.s32.totalorder %s27, 7
      %p176 = por %p174, %p175
      %p178 = scmp.ne.s32.totalorder %s163, %s177
      %p179 = scmp.eq.s32.totalorder %s27, 0
      %p180 = por %p178, %p179
      %s181 = ssub.s32 %s21, %s28
      %p182 = scmp.eq.s32.totalorder %s181, 0
      %s184 = sadd.s32 %s183, 1
      %s185 = scalar_select %p182, %s183, %s184
      %p188 = pneg %p182
      %p189 = scmp.eq.s32.totalorder %s21, 7
      %p190 = por %p188, %p189
      %p191 = scmp.ne.s32.totalorder %s183, %s186
      %p192 = scmp.eq.s32.totalorder %s21, 0
      %p193 = por %p191, %p192
      %p194 = scmp.ne.s32.totalorder %s183, %s186
      %p195 = scmp.eq.s32.totalorder %s26, 7
      %p196 = por %p194, %p195
      %p197 = scmp.ne.s32.totalorder %s186, %s187
      %p198 = scmp.eq.s32.totalorder %s26, 0
      %p199 = por %p197, %p198
      %p200 = scmp.ne.s32.totalorder %s186, %s187
      %p201 = scmp.eq.s32.totalorder %s27, 7
      %p202 = por %p200, %p201
      %p204 = scmp.ne.s32.totalorder %s187, %s203
      %p205 = scmp.eq.s32.totalorder %s27, 0
      %p206 = por %p204, %p205
      %p207 = scmp.le.s32.totalorder 1, %s21
      %p208 = scmp.lt.s32.totalorder %s21, 9
      %p209 = pnand %p207, %p208
      %p210 = pneg %p209
      // Predicated region
      $region9: #{tpu_custom_call.1} parent=5 // pred_check
        _
      $region10: #{tpu_custom_call.1} parent=5 // pred_check_branch
        %212 = sbr.rel (%p209) target = $region12
      $region11: #{tpu_custom_call.1} parent=5 // pred_region
        %s213 = ssub.s32 %s21, 1
        // Predicated region
        $region13: #{tpu_custom_call.1} parent=11 // pred_check
          %p214 = pneg %p68
        $region14: #{tpu_custom_call.1} parent=11 // pred_check_branch
          %216 = sbr.rel (%p214) target = $region16
        $region15: #{tpu_custom_call.1} parent=11 // pred_region
          %218 = vsyncadd [#allocation8], 0
          %s220 = sshll.u32 %s1, 4
          %s221 = int_to_ptr.hbm [resolvable:$true] %s220
          %s222 = sshll.u32 [#allocation7], 4
          %s223 = int_to_ptr.vmem [resolvable:$true] %s222
          %225 = dma.hbm_to_vmem [thread:$0]  %s221, 32, %s223, [#allocation8]
        $region16: #{tpu_custom_call.1} parent=11 // pred_fallthru
          _
        // Predicated region
        $region17: #{tpu_custom_call.1} parent=11 // pred_check
          %p226 = pneg %p89
        $region18: #{tpu_custom_call.1} parent=11 // pred_check_branch
          %228 = sbr.rel (%p226) target = $region20
        $region19: #{tpu_custom_call.1} parent=11 // pred_region
          %230 = vsyncadd [#allocation8], 0
          %s232 = sshll.u32 %s2, 4
          %s233 = int_to_ptr.hbm [resolvable:$true] %s232
          %s234 = sshll.u32 [#allocation9], 4
          %s235 = int_to_ptr.vmem [resolvable:$true] %s234
          %237 = dma.hbm_to_vmem [thread:$0]  %s233, 32, %s235, [#allocation8]
        $region20: #{tpu_custom_call.1} parent=11 // pred_fallthru
          _
        // Predicated region
        $region21: #{tpu_custom_call.1} parent=11 // pred_check
          %p238 = pneg %p110
        $region22: #{tpu_custom_call.1} parent=11 // pred_check_branch
          %240 = sbr.rel (%p238) target = $region24
        $region23: #{tpu_custom_call.1} parent=11 // pred_region
          %242 = vsyncadd [#allocation11], 0
          %s243 = sshll.u32 %s3, 4
          %s244 = int_to_ptr.hbm [resolvable:$true] %s243
          %s245 = sshll.u32 [#allocation10], 4
          %s246 = int_to_ptr.vmem [resolvable:$true] %s245
          %251 = dma.hbm_to_vmem [thread:$0]  %s244, 768, %s246, [#allocation11], 128, 128, 8
        $region24: #{tpu_custom_call.1} parent=11 // pred_fallthru
          _
        // Predicated region
        $region25: #{tpu_custom_call.1} parent=11 // pred_check
          %p252 = pneg %p131
        $region26: #{tpu_custom_call.1} parent=11 // pred_check_branch
          %254 = sbr.rel (%p252) target = $region28
        $region27: #{tpu_custom_call.1} parent=11 // pred_region
          _
        $region28: #{tpu_custom_call.1} parent=11 // pred_fallthru
          _
        // Predicated region
        $region29: #{tpu_custom_call.1} parent=11 // pred_check
          %p255 = pneg %p152
        $region30: #{tpu_custom_call.1} parent=11 // pred_check_branch
          %257 = sbr.rel (%p255) target = $region32
        $region31: #{tpu_custom_call.1} parent=11 // pred_region
          %259 = vsyncadd [#allocation11], 0
          %s260 = sshll.u32 %s5, 4
          %s261 = int_to_ptr.hbm [resolvable:$true] %s260
          %s262 = sshll.u32 [#allocation12], 4
          %s263 = int_to_ptr.vmem [resolvable:$true] %s262
          %268 = dma.hbm_to_vmem [thread:$0]  %s261, 512, %s263, [#allocation11], 128, 128, 8
        $region32: #{tpu_custom_call.1} parent=11 // pred_fallthru
          _
        // Predicated region
        $region33: #{tpu_custom_call.1} parent=11 // pred_check
          %p269 = pneg %p173
        $region34: #{tpu_custom_call.1} parent=11 // pred_check_branch
          %271 = sbr.rel (%p269) target = $region36
        $region35: #{tpu_custom_call.1} parent=11 // pred_region
          _
        $region36: #{tpu_custom_call.1} parent=11 // pred_fallthru
          _
      $region12: #{tpu_custom_call.1} parent=5 // pred_fallthru
        _
      %p272 = scmp.lt.s32.totalorder %s21, 8
      // Predicated region
      $region37: #{tpu_custom_call.1} parent=5 // pred_check
        %p273 = pneg %p272
      $region38: #{tpu_custom_call.1} parent=5 // pred_check_branch
        %275 = sbr.rel (%p273) target = $region40
      $region39: #{tpu_custom_call.1} parent=5 // pred_region
        // Predicated region
        $region41: #{tpu_custom_call.1} parent=39 // pred_check
          %p276 = pneg %p41
        $region42: #{tpu_custom_call.1} parent=39 // pred_check_branch
          %278 = sbr.rel (%p276) target = $region44
        $region43: #{tpu_custom_call.1} parent=39 // pred_region
          %s279 = sand.u32 %s31, 1
          %s280 = scalar_lea.sflag [#allocation5], %s279
          %s281 = sand.u32 %s31, 1
          %s282 = smul.addr %s281, 2
          %s283 = scalar_lea.vmem [#allocation4], %s282
          %285 = vsyncadd %s280, 0
          %s286 = smul.addr %s21, 2
          %s287 = scalar_lea.hbm %s0, %s286
          %s289 = sshll.u32 %s287, 4
          %s290 = int_to_ptr.hbm [resolvable:$true] %s289
          %s291 = sshll.u32 %s283, 4
          %s292 = int_to_ptr.vmem [resolvable:$true] %s291
          %294 = dma.hbm_to_vmem [thread:$0]  %s290, 32, %s292, %s280
        $region44: #{tpu_custom_call.1} parent=39 // pred_fallthru
          _
      $region40: #{tpu_custom_call.1} parent=5 // pred_fallthru
        _
      %p295 = scmp.le.s32.totalorder 1, %s21
      %p296 = scmp.lt.s32.totalorder %s21, 9
      %p297 = pnand %p295, %p296
      %p298 = pneg %p297
      // Predicated region
      $region45: #{tpu_custom_call.1} parent=5 // pred_check
        _
      $region46: #{tpu_custom_call.1} parent=5 // pred_check_branch
        %300 = sbr.rel (%p297) target = $region48
      $region47: #{tpu_custom_call.1} parent=5 // pred_region
        %s301 = ssub.s32 %s21, 1
        %s302 = sand.u32 %s34, 1
        %s303 = scalar_lea.sflag [#allocation5], %s302
        %s304 = sand.u32 %s34, 1
        %s305 = smul.addr %s304, 2
        %s306 = scalar_lea.vmem [#allocation4], %s305
        // Predicated region
        $region49: #{tpu_custom_call.1} parent=47 // pred_check
          %p307 = pneg %p47
        $region50: #{tpu_custom_call.1} parent=47 // pred_check_branch
          %309 = sbr.rel (%p307) target = $region52
        $region51: #{tpu_custom_call.1} parent=47 // pred_region
          %311 = dma.done %s303, 32
        $region52: #{tpu_custom_call.1} parent=47 // pred_fallthru
          _
        // Predicated region
        $region53: #{tpu_custom_call.1} parent=47 // pred_check
          %p312 = pneg %p68
        $region54: #{tpu_custom_call.1} parent=47 // pred_check_branch
          %314 = sbr.rel (%p312) target = $region56
        $region55: #{tpu_custom_call.1} parent=47 // pred_region
          %316 = dma.done [#allocation8], 32
        $region56: #{tpu_custom_call.1} parent=47 // pred_fallthru
          _
        // Predicated region
        $region57: #{tpu_custom_call.1} parent=47 // pred_check
          %p317 = pneg %p89
        $region58: #{tpu_custom_call.1} parent=47 // pred_check_branch
          %319 = sbr.rel (%p317) target = $region60
        $region59: #{tpu_custom_call.1} parent=47 // pred_region
          %321 = dma.done [#allocation8], 32
        $region60: #{tpu_custom_call.1} parent=47 // pred_fallthru
          _
        // Predicated region
        $region61: #{tpu_custom_call.1} parent=47 // pred_check
          %p322 = pneg %p110
        $region62: #{tpu_custom_call.1} parent=47 // pred_check_branch
          %324 = sbr.rel (%p322) target = $region64
        $region63: #{tpu_custom_call.1} parent=47 // pred_region
          %326 = dma.done [#allocation11], 768
        $region64: #{tpu_custom_call.1} parent=47 // pred_fallthru
          _
        // Predicated region
        $region65: #{tpu_custom_call.1} parent=47 // pred_check
          %p327 = pneg %p152
        $region66: #{tpu_custom_call.1} parent=47 // pred_check_branch
          %329 = sbr.rel (%p327) target = $region68
        $region67: #{tpu_custom_call.1} parent=47 // pred_region
          %331 = dma.done [#allocation11], 512
        $region68: #{tpu_custom_call.1} parent=47 // pred_fallthru
          _
        %s332 = sand.u32 %s34, 1
        %s333 = scalar_lea.sflag [#allocation5], %s332
        %s334 = sand.u32 %s34, 1
        %s335 = smul.addr %s334, 2
        %s336 = scalar_lea.vmem [#allocation4], %s335
        %p337 = pneg %p47
        %p338 = pneg %p44
        %p339 = pneg %p68
        %p340 = pneg %p65
        %p341 = pneg %p89
        %p342 = pneg %p86
        %p343 = pneg %p110
        %p344 = pneg %p107
        %p345 = pneg %p131
        %p346 = pneg %p128
        %p347 = pneg %p152
        %p348 = pneg %p149
        %p349 = pneg %p173
        %p350 = pneg %p170
        %p351 = pneg %p199
        %p352 = pneg %p196
        %s353 = sand.u32 %s186, 1
        %s354 = scalar_lea.sflag [#allocation6], %s353
        %s355 = sand.u32 %s186, 1
        %s356 = smul.addr %s355, 2
        %s357 = scalar_lea.vmem [#allocation13], %s356
        %p358 = scmp.eq.s32.totalorder %s26, 0
        // Predicated region
        $region69: #{tpu_custom_call.1} parent=47 // pred_check
          %p359 = pneg %p358
        $region70: #{tpu_custom_call.1} parent=47 // pred_check_branch
          %361 = sbr.rel (%p359) target = $region72
        $region71: #{tpu_custom_call.1} parent=47 // pred_region
          %v362 = vld [vmem:[#allocation7] sm:$0x3]
          %vm363 = vcmask 254976
          %364 = vst.msk [vmem:[#allocation2] sm:$0x3] %vm363, %v362
          %v365 = vld [vmem:[#allocation9] sm:$0x3]
          %366 = vst.msk [vmem:[#allocation3] sm:$0x3] %vm363, %v365
        $region72: #{tpu_custom_call.1} parent=47 // pred_fallthru
          _
        %v367 = vld [vmem:[%s306] sm:$0x3]
        %v368 = vld [vmem:[#allocation2] sm:$0x3]
        %370 = vrot.lane.b32.xlu0 %v368, 16
        %v371 = vpop.permute.xlu0 %370
        %vm373 = vcmask 130048
        %v374 = vsel %vm373, %v367, %v371
        %v375 = vld [vmem:[#allocation10] sm:$0xff]
        %v376 = vld [vmem:[#allocation10 + $0x8] sm:$0xff]
        %v377 = vld [vmem:[#allocation10 + $0x10] sm:$0xff]
        %v378 = vld [vmem:[#allocation10 + $0x18] sm:$0xff]
        %v379 = vld [vmem:[#allocation10 + $0x20] sm:$0xff]
        %v380 = vld [vmem:[#allocation10 + $0x28] sm:$0xff]
        %v381 = vld [vmem:[%s4] sm:$0x1]
        %v383 = vperm.slane %v381, 0
        %vm385 = vcmask 392192
        %v387 = vsel %vm385, %v374, 0
        %389 = vmatpush.msra.mxu0 0.0
        %390 = vmatpush.msra.mxu0 0.0
        %391 = vmatpush.msra.mxu0 0.0
        %392 = vmatpush.msra.mxu0 0.0
        %393 = vmatpush.msra.mxu0 0.0
        %394 = vmatpush.msra.mxu0 0.0
        %395 = vmatpush.msra.mxu0 0.0
        %396 = vmatpush.msra.mxu0 0.0
        %397 = vmatpush.msra.mxu0 0.0
        %398 = vmatpush.msra.mxu0 0.0
        %399 = vmatpush.msra.mxu0 %v380
        %400 = vmatpush.msra.mxu0 %v379
        %401 = vmatpush.msra.mxu0 %v378
        %402 = vmatpush.msra.mxu0 %v377
        %403 = vmatpush.msra.mxu0 %v376
        %404 = vmatpush.msra.mxu0 %v375
        %405 = vmatmul.f32.gmra.mxu0 %v387
        %v406 = vpop.f32.mrf.mxu0
        %v407 = vadd.f32 %v383, %v406
        %408 = vdwg.mxu0
        %v409 = vmul.f32 %v407, 0.5
        %v410 = vtanh.pop %v409
        %v411 = vmul.f32 %v410, 0.5
        %v412 = vadd.f32 %v411, 0.5
        %v413 = vtanh.pop %v407
        %v414 = vld [vmem:[#allocation3] sm:$0x3]
        %416 = vrot.lane.b32.xlu0 %v414, 32
        %v417 = vpop.permute.xlu0 %416
        %v419 = vmul.f32 %v412, %v417
        %421 = vrot.lane.b32.xlu0 %v413, 64
        %v422 = vpop.permute.xlu0 %421
        %v424 = vmul.f32 %v412, %v422
        %426 = vrot.lane.b32.xlu0 %v424, 32
        %v427 = vpop.permute.xlu0 %426
        %v429 = vadd.f32 %v419, %v427
        %v430 = vtanh.pop %v429
        %432 = vrot.lane.b32.xlu0 %v430, 64
        %v433 = vpop.permute.xlu0 %432
        %v435 = vmul.f32 %v412, %v433
        %v436 = vld [vmem:[#allocation12] sm:$0xff]
        %v437 = vld [vmem:[#allocation12 + $0x8] sm:$0xff]
        %v438 = vld [vmem:[#allocation12 + $0x10] sm:$0xff]
        %v439 = vld [vmem:[#allocation12 + $0x18] sm:$0xff]
        %v440 = vld [vmem:[%s6] sm:$0x1]
        %v442 = vperm.slane %v440, 0
        %445 = vrot.lane.b32.xlu0 %v435, 32
        %v446 = vpop.permute.xlu0 %445
        %vm447 = vcmask 261120
        %v448 = vsel %vm447, %v446, 0
        %450 = vmatpush.msra.mxu0 0.0
        %451 = vmatpush.msra.mxu0 0.0
        %452 = vmatpush.msra.mxu0 0.0
        %453 = vmatpush.msra.mxu0 0.0
        %454 = vmatpush.msra.mxu0 0.0
        %455 = vmatpush.msra.mxu0 0.0
        %456 = vmatpush.msra.mxu0 0.0
        %457 = vmatpush.msra.mxu0 0.0
        %458 = vmatpush.msra.mxu0 0.0
        %459 = vmatpush.msra.mxu0 0.0
        %460 = vmatpush.msra.mxu0 0.0
        %461 = vmatpush.msra.mxu0 0.0
        %462 = vmatpush.msra.mxu0 %v439
        %463 = vmatpush.msra.mxu0 %v438
        %464 = vmatpush.msra.mxu0 %v437
        %465 = vmatpush.msra.mxu0 %v436
        %466 = vmatmul.f32.gmra.mxu0 %v448
        %v467 = vpop.f32.mrf.mxu0
        %v468 = vadd.f32 %v442, %v467
        %469 = vdwg.mxu0
        %v470 = vmul.f32 %v468, 0.5
        %v471 = vtanh.pop %v470
        %v472 = vmul.f32 %v471, 0.5
        %v473 = vadd.f32 %v472, 0.5
        %475 = vrot.lane.b32.xlu0 %v473, 96
        %v476 = vpop.permute.xlu0 %475
        %v478 = vmul.f32 %v435, %v476
        %v479 = vmul.f32 %v478, 0.8
        %481 = vrot.lane.b32.xlu0 %v479, 32
        %v482 = vpop.permute.xlu0 %481
        %vm484 = vcmask 254976
        %485 = vst.msk [vmem:[#allocation2] sm:$0x3] %vm484, %v482
        %487 = vrot.lane.b32.xlu0 %v429, 96
        %v488 = vpop.permute.xlu0 %487
        %490 = vst.msk [vmem:[#allocation3] sm:$0x3] %vm484, %v488
        %v491 = vsel %vm447, %v482, %v429
        %vm492 = vcmask 517120
        %493 = vst.msk [vmem:[%s357] sm:$0x3] %vm492, %v491
        %s494 = sand.u32 %s186, 1
        %s495 = scalar_lea.sflag [#allocation6], %s494
        %s496 = sand.u32 %s186, 1
        %s497 = smul.addr %s496, 2
        %s498 = scalar_lea.vmem [#allocation13], %s497
        // Predicated region
        $region73: #{tpu_custom_call.1} parent=47 // pred_check
          %p499 = pneg %p196
        $region74: #{tpu_custom_call.1} parent=47 // pred_check_branch
          %501 = sbr.rel (%p499) target = $region76
        $region75: #{tpu_custom_call.1} parent=47 // pred_region
          %503 = vsyncadd %s495, 0
          %s504 = smul.addr %s26, 2
          %s505 = scalar_lea.hbm %s7, %s504
          %s507 = sshll.u32 %s498, 4
          %s508 = int_to_ptr.vmem [resolvable:$true] %s507
          %s509 = sshll.u32 %s505, 4
          %s510 = int_to_ptr.hbm [resolvable:$true] %s509
          %512 = dma.vmem_to_hbm [thread:$0]  %s508, 32, %s510, %s495
        $region76: #{tpu_custom_call.1} parent=47 // pred_fallthru
          _
      $region48: #{tpu_custom_call.1} parent=5 // pred_fallthru
        _
      %p513 = scmp.le.s32.totalorder 2, %s21
      // Predicated region
      $region77: #{tpu_custom_call.1} parent=5 // pred_check
        %p514 = pneg %p513
      $region78: #{tpu_custom_call.1} parent=5 // pred_check_branch
        %516 = sbr.rel (%p514) target = $region80
      $region79: #{tpu_custom_call.1} parent=5 // pred_region
        %s517 = ssub.s32 %s21, 2
        // Predicated region
        $region81: #{tpu_custom_call.1} parent=79 // pred_check
          %p518 = pneg %p202
        $region82: #{tpu_custom_call.1} parent=79 // pred_check_branch
          %520 = sbr.rel (%p518) target = $region84
        $region83: #{tpu_custom_call.1} parent=79 // pred_region
          %s521 = sand.u32 %s187, 1
          %s522 = scalar_lea.sflag [#allocation6], %s521
          %s523 = sand.u32 %s187, 1
          %s524 = smul.addr %s523, 2
          %s525 = scalar_lea.vmem [#allocation13], %s524
          %527 = dma.done %s522, 32
        $region84: #{tpu_custom_call.1} parent=79 // pred_fallthru
          _
      $region80: #{tpu_custom_call.1} parent=5 // pred_fallthru
        _
    $region6: #{tpu_custom_call.1} parent=1 // loop_footer
      %s25 = sadd.s32 1, %s21
    $region7: #{tpu_custom_call.1} parent=1 // loop_footer_branch
      %20 = sbr.rel target = $region3
    $region8: #{tpu_custom_call.1} parent=1 // loop_exit
      _
    %528 = vsyncpa [#allocation5], 1
    %s529 = scalar_lea.sflag [#allocation5], 1
    %530 = vsyncpa %s529, 1
    %531 = vsyncpa [#allocation8], 1
    %532 = vsyncpa [#allocation11], 1
    %533 = vsyncpa [#allocation6], 1
    %s534 = scalar_lea.sflag [#allocation6], 1
    %535 = vsyncpa %s534, 1

</llo_original>
